<compile_context>
chip_gen: v7x
topology: tpu7x:2x2x1
jax: 0.10.0
libtpu: 0.0.40
codegen_flags: <defaults>
</compile_context>

<pallas_src>
import jax
import jax.numpy as jnp
from jax.experimental import pallas as pl
from jax.experimental.pallas import tpu as pltpu

# ---- problem sizes (small, consistent with the module) ----
N = 8              # number of smoothing samples (self.N)
BETA = 1.0         # self.beta
C, H, W_SP = 4, 16, 16
D = C * H * W_SP   # 1024 flattened features
K = 10             # real number of classes of the synthetic model
KP = 128           # lane-padded class axis (multiple of 128)
NEG_BIG = -1e30    # bias value for padded classes -> exp() == 0
MAX_M = 256        # target max matmul rows per grid step (fills a v6e/v7x MXU pass)

# The -1e30 padded-bias trick relies on the row max being a finite real-class
# logit; that only holds for positive beta.
assert BETA > 0, "padded-bias (-1e30) trick requires BETA > 0"


def smoothing_kernel(x_ref, noise_ref, w_ref, b_ref, out_ref):
    # x_ref:     (TB, 1, D)  tile of flattened images (grid axis = image tile)
    # noise_ref: (1, N, D)   per-sample additive noise, VMEM-resident
    # w_ref:     (D, KP)     bf16 weight, zero-padded columns, resident
    # b_ref:     (1, KP)     f32 bias, padded cols = -1e30, resident
    # out_ref:   (TB, KP)    log of averaged softmax (padded cols sliced outside)
    tb = x_ref.shape[0]

    # repeat(N) + noise for every image in the tile.  f32 add keeps the (8,128)
    # sublane tiling exact (N == 8), so the merge-reshape below is layout-free;
    # cast to bf16 in 2-D for the MXU (f32 accumulate via preferred_element_type).
    xs = x_ref[...] + noise_ref[...]                       # (TB, N, D) f32
    xs2 = xs.reshape(tb * N, D).astype(jnp.bfloat16)       # (TB*N, D), M mult of 16

    # synthetic model forward: one MXU matmul per grid step.
    logits = jnp.dot(xs2, w_ref[...], preferred_element_type=jnp.float32)
    logits = logits + b_ref[...]                           # (TB*N, KP)

    # softmax(beta * logits, dim=1), numerically stable; beta-mul folded at
    # trace time when BETA == 1.0.  Padded cols ~ -1e30 -> exp() == 0; row max
    # is always a finite real-class logit (BETA > 0), so no -inf - -inf NaNs.
    z = logits if BETA == 1.0 else BETA * logits
    z = z - jnp.max(z, axis=1, keepdims=True)
    e = jnp.exp(z)
    # Fold the 1/N of the mean into the softmax denominator (EUP reciprocal).
    p = e * pl.reciprocal(jnp.sum(e, axis=1, keepdims=True) * jnp.float32(N),
                          approx=True)

    # mean over the N smoothing samples (already scaled by 1/N), then
    # log(clamp(min=1e-20)).  Lane-dense (TB, 128) store -> unmasked vst.
    avg = jnp.sum(p.reshape(tb, N, KP), axis=1)            # (TB, KP)
    out_ref[...] = jnp.log(jnp.maximum(avg, 1e-20))


def prepare_classifier_params(w, b):
    """One-time lane-padding / casting of the classifier (hoisted out of fwd)."""
    w_p = jnp.pad(w.astype(jnp.bfloat16), ((0, 0), (0, KP - K)))             # (D, KP)
    b_p = jnp.pad(b.astype(jnp.float32), ((0, 0), (0, KP - K)),
                  constant_values=NEG_BIG)                                    # (1, KP)
    return w_p, b_p


def smoothing_wrapper_forward(x_nchw, t, noise, w_p, b_p):
    # TODO(synk): `t` is unused by the synthetic linear model; a real diffusion
    # classifier would condition on the timestep.
    del t
    B = x_nchw.shape[0]
    x3 = x_nchw.reshape(B, 1, D).astype(jnp.float32)          # (B, 1, D)
    noise3 = noise.reshape(1, N, D).astype(jnp.float32)       # (1, N, D)

    # Pick the image tile so TB*N rows feed the MXU per step (capped at MAX_M).
    # For the test sizes (B=4, N=8) this is a single grid step with M = 32.
    if B * N <= MAX_M:
        tb = B
    else:
        # need tb % 8 == 0 (or tb == B) for the (8,128) constraint on the
        # (tb, KP) output block; fall back to one big step if no divisor fits.
        cands = [d for d in range(1, B + 1)
                 if B % d == 0 and d * N <= MAX_M and d % 8 == 0]
        tb = max(cands) if cands else B
    steps = B // tb

    out = pl.pallas_call(
        smoothing_kernel,
        out_shape=jax.ShapeDtypeStruct((B, KP), jnp.float32),
        grid=(steps,),
        in_specs=[
            pl.BlockSpec((tb, 1, D), lambda i: (i, 0, 0)),   # image tile
            pl.BlockSpec((1, N, D), lambda i: (0, 0, 0)),    # noise: resident
            pl.BlockSpec((D, KP), lambda i: (0, 0)),         # W: resident
            pl.BlockSpec((1, KP), lambda i: (0, 0)),         # b: resident
        ],
        out_specs=pl.BlockSpec((tb, KP), lambda i: (i, 0)),
        compiler_params=pltpu.CompilerParams(
            # Only shard across TCs (v7x megacore) once there are enough image
            # tiles to amortize duplicating the resident W/noise DMA per core.
            dimension_semantics=("parallel" if steps >= 8 else "arbitrary",)),
    )(x3, noise3, w_p, b_p)

    # Drop lane padding; one (K,) log-of-averaged-softmax row per image.
    return out[:, :K]


def reference_forward(x_nchw, noise, w, b):
    B = x_nchw.shape[0]
    xs = x_nchw.reshape(B, 1, D) + noise.reshape(1, N, D)            # (B, N, D)
    logits = jnp.einsum("bnd,dk->bnk", xs, w) + b                    # (B, N, K)
    p = jax.nn.softmax(BETA * logits, axis=-1)
    avg = jnp.mean(p, axis=1)                                        # (B, K)
    return jnp.log(jnp.maximum(avg, 1e-20))


if __name__ == "__main__":
    key = jax.random.PRNGKey(0)
    kx, kn, kw, kb = jax.random.split(key, 4)

    B = 4
    x = jax.random.normal(kx, (B, C, H, W_SP), dtype=jnp.float32)        # NCHW batch
    noise = 0.25 * jax.random.normal(kn, (N, C, H, W_SP), dtype=jnp.float32)
    w = 0.05 * jax.random.normal(kw, (D, K), dtype=jnp.float32)
    b = 0.01 * jax.random.normal(kb, (1, K), dtype=jnp.float32)
    t = jnp.array(0.5, dtype=jnp.float32)   # timestep (unused by synthetic model)

    # Hoisted one-time padding / casting of the classifier parameters.
    w_p, b_p = prepare_classifier_params(w, b)

    out = smoothing_wrapper_forward(x, t, noise, w_p, b_p)
    out = jax.block_until_ready(out)

    ref = reference_forward(x, noise, w, b)
    assert out.shape == (B, K)
    # bf16 MXU operands + approx reciprocal -> relaxed tolerance vs f32 reference.
    assert jnp.allclose(out, ref, atol=5e-2, rtol=5e-2), (out, ref)

    print("KERNEL_OK")
</pallas_src>

<mosaic_0001>
module attributes {stable_mosaic.version = 11 : i64} {
  func.func @smoothing_kernel(%arg0: i32, %arg1: memref<4x1x1024xf32, #tpu.memory_space<vmem>>, %arg2: memref<1x8x1024xf32, #tpu.memory_space<vmem>>, %arg3: memref<1024x128xbf16, #tpu.memory_space<vmem>>, %arg4: memref<1x128xf32, #tpu.memory_space<vmem>>, %arg5: memref<4x128xf32, #tpu.memory_space<vmem>>) attributes {dimension_semantics = [#tpu.dimension_semantics<arbitrary>], iteration_bounds = array<i64: 1>, scalar_prefetch = 0 : i64, scratch_operands = 0 : i64, tpu.core_type = #tpu.core_type<tc>, window_params = [{transform_indices = @transform_0, window_bounds = array<i64: 4, 1, 1024>}, {pipeline_mode = #tpu.pipeline_mode<synchronous>, transform_indices = @transform_1, window_bounds = array<i64: 1, 8, 1024>}, {pipeline_mode = #tpu.pipeline_mode<synchronous>, transform_indices = @transform_2, window_bounds = array<i64: 1024, 128>}, {pipeline_mode = #tpu.pipeline_mode<synchronous>, transform_indices = @transform_3, window_bounds = array<i64: 1, 128>}, {transform_indices = @transform_4, window_bounds = array<i64: 4, 128>}]} {
    %c0 = arith.constant 0 : index
    %c0_0 = arith.constant 0 : index
    %c0_1 = arith.constant 0 : index
    %0 = vector.load %arg1[%c0, %c0_0, %c0_1] : memref<4x1x1024xf32, #tpu.memory_space<vmem>>, vector<4x1x1024xf32>
    %c0_2 = arith.constant 0 : index
    %c0_3 = arith.constant 0 : index
    %c0_4 = arith.constant 0 : index
    %1 = vector.load %arg2[%c0_2, %c0_3, %c0_4] : memref<1x8x1024xf32, #tpu.memory_space<vmem>>, vector<1x8x1024xf32>
    %2 = vector.broadcast %0 : vector<4x1x1024xf32> to vector<4x8x1024xf32>
    %3 = vector.broadcast %1 : vector<1x8x1024xf32> to vector<4x8x1024xf32>
    %4 = arith.addf %2, %3 : vector<4x8x1024xf32>
    %5 = vector.shape_cast %4 : vector<4x8x1024xf32> to vector<32x1024xf32>
    %6 = arith.truncf %5 : vector<32x1024xf32> to vector<32x1024xbf16>
    %c0_5 = arith.constant 0 : index
    %c0_6 = arith.constant 0 : index
    %7 = vector.load %arg3[%c0_5, %c0_6] : memref<1024x128xbf16, #tpu.memory_space<vmem>>, vector<1024x128xbf16>
    %cst = arith.constant dense<0.000000e+00> : vector<32x128xf32>
    %8 = tpu.matmul %6, %7, %cst {dimension_numbers = #tpu.dot_dimension_numbers<[1], [0], [0], [1], [0, 0, 1, 1], [], []>} : vector<32x1024xbf16>, vector<1024x128xbf16>, vector<32x128xf32> -> vector<32x128xf32>
    %c0_7 = arith.constant 0 : index
    %c0_8 = arith.constant 0 : index
    %9 = vector.load %arg4[%c0_7, %c0_8] : memref<1x128xf32, #tpu.memory_space<vmem>>, vector<1x128xf32>
    %10 = vector.broadcast %9 : vector<1x128xf32> to vector<32x128xf32>
    %11 = arith.addf %8, %10 : vector<32x128xf32>
    %cst_9 = arith.constant dense<0xFF800000> : vector<32xf32>
    %12 = vector.multi_reduction <maximumf>, %11, %cst_9 [1] : vector<32x128xf32> to vector<32xf32>
    %13 = vector.shape_cast %12 : vector<32xf32> to vector<32x1xf32>
    %14 = vector.broadcast %13 : vector<32x1xf32> to vector<32x128xf32>
    %15 = arith.subf %11, %14 : vector<32x128xf32>
    %16 = math.exp %15 : vector<32x128xf32>
    %cst_10 = arith.constant dense<0.000000e+00> : vector<32xf32>
    %17 = vector.multi_reduction <add>, %16, %cst_10 [1] : vector<32x128xf32> to vector<32xf32>
    %18 = vector.shape_cast %17 : vector<32xf32> to vector<32x1xf32>
    %cst_11 = arith.constant 8.000000e+00 : f32
    %19 = vector.broadcast %cst_11 : f32 to vector<32x1xf32>
    %20 = arith.mulf %18, %19 : vector<32x1xf32>
    %21 = tpu.reciprocal %20 {approx = true} : vector<32x1xf32> -> vector<32x1xf32>
    %22 = vector.broadcast %21 : vector<32x1xf32> to vector<32x128xf32>
    %23 = arith.mulf %16, %22 : vector<32x128xf32>
    %24 = vector.shape_cast %23 : vector<32x128xf32> to vector<4x8x128xf32>
    %cst_12 = arith.constant dense<0.000000e+00> : vector<4x128xf32>
    %25 = vector.multi_reduction <add>, %24, %cst_12 [1] : vector<4x8x128xf32> to vector<4x128xf32>
    %cst_13 = arith.constant 9.99999968E-21 : f32
    %26 = vector.broadcast %cst_13 : f32 to vector<4x128xf32>
    %27 = arith.maximumf %25, %26 : vector<4x128xf32>
    %28 = math.log %27 : vector<4x128xf32>
    %c0_14 = arith.constant 0 : index
    %c0_15 = arith.constant 0 : index
    %29 = vector.load %arg5[%c0_14, %c0_15] : memref<4x128xf32, #tpu.memory_space<vmem>>, vector<4x128xf32>
    tpu.vector_store %arg5[%c0_14, %c0_15], %28 {strides = array<i32>} : memref<4x128xf32, #tpu.memory_space<vmem>>, vector<4x128xf32>,
    return
  }
  func.func @transform_0(%arg0: i32) -> (i32, i32, i32) {
    %c0_i32 = arith.constant 0 : i32
    %c0_i32_0 = arith.constant 0 : i32
    %c0_i32_1 = arith.constant 0 : i32
    return %arg0, %c0_i32, %c0_i32_0 : i32, i32, i32
  }
  func.func @transform_1(%arg0: i32) -> (i32, i32, i32) {
    %c0_i32 = arith.constant 0 : i32
    %c0_i32_0 = arith.constant 0 : i32
    %c0_i32_1 = arith.constant 0 : i32
    %c0_i32_2 = arith.constant 0 : i32
    return %c0_i32, %c0_i32_0, %c0_i32_1 : i32, i32, i32
  }
  func.func @transform_2(%arg0: i32) -> (i32, i32) {
    %c0_i32 = arith.constant 0 : i32
    %c0_i32_0 = arith.constant 0 : i32
    %c0_i32_1 = arith.constant 0 : i32
    return %c0_i32, %c0_i32_0 : i32, i32
  }
  func.func @transform_3(%arg0: i32) -> (i32, i32) {
    %c0_i32 = arith.constant 0 : i32
    %c0_i32_0 = arith.constant 0 : i32
    %c0_i32_1 = arith.constant 0 : i32
    return %c0_i32, %c0_i32_0 : i32, i32
  }
  func.func @transform_4(%arg0: i32) -> (i32, i32) {
    %c0_i32 = arith.constant 0 : i32
    %c0_i32_0 = arith.constant 0 : i32
    return %arg0, %c0_i32 : i32, i32
  }
}

</mosaic_0001>

<llo_original>
// kernel: tpu_custom_call.1
$region0: #{tpu_custom_call.1}
  #allocation0 [shape = 'u32[]', space=smem, size = 0x4, offset = 0x4, fixed_abs, tag = 'smem constant byte address 0x4 - core index']
  #allocation1 [shape = 'u32[144,128]{1,0:T(1,128)}', space=vmem, size = 0x12000, scoped, tag = 'internal scratch']
  %s0 = inlined_call_operand.hbm [shape: f32[4,1,1024], index: 0, kind: input, shape index: {}]
  %s1 = inlined_call_operand.hbm [shape: f32[1,8,1024], index: 1, kind: input, shape index: {}]
  %s2 = inlined_call_operand.hbm [shape: bf16[1024,128], index: 2, kind: input, shape index: {}]
  %s3 = inlined_call_operand.vmem [shape: f32[1,128], index: 3, kind: input, shape index: {}]
  %s4 = inlined_call_operand.hbm [shape: f32[4,128], index: 4, kind: output, shape index: {}]
  %s5 = sld [smem:[#allocation0]]
  $region38: #{tpu_custom_call.1} parent=0
    _
  %s7 = ssub.s32 1, %s5
  %s8 = scalar_select 0, %s7, %s5
  $region1: #{tpu_custom_call.1} parent=0
    #allocation2 [shape = 'u8[16384]{0}', space=vmem, size = 0x4000, scoped, tag = 'input window, operand 0, single buffered']
    #allocation3 [shape = 's32[1]{0}', space=sflag, size = 0x4, scoped, tag = 'scoped memory for tpu_custom_call.1']
    #allocation4 [shape = 's32[1]{0}', space=sflag, size = 0x4, scoped, tag = 'scoped memory for tpu_custom_call.1']
    #allocation5 [shape = 'u8[32768]{0}', space=vmem, size = 0x8000, scoped, tag = 'input window, operand 1, single buffered']
    #allocation6 [shape = 's32[1]{0}', space=sflag, size = 0x4, scoped, tag = 'scoped memory for tpu_custom_call.1']
    #allocation7 [shape = 'u8[262144]{0}', space=vmem, size = 0x40000, scoped, tag = 'input window, operand 2, single buffered']
    #allocation8 [shape = 'u8[2048]{0}', space=vmem, size = 0x800, scoped, tag = 'output window, operand 0, single buffered']
    %9 = vsyncpa [#allocation3], 0
    %10 = vsyncpa [#allocation6], 0
    %11 = vsyncpa [#allocation4], 0
    // Predicated region
    $region2: #{tpu_custom_call.1} parent=1 // pred_check
      _
    $region3: #{tpu_custom_call.1} parent=1 // pred_check_branch
      %13 = sbr.rel (0) target = $region5
    $region4: #{tpu_custom_call.1} parent=1 // pred_region
      %s15 = ssub.s32 512, 512
      %16 = vsyncadd [#allocation3], %s15
      %s17 = sshll.u32 [#allocation2], 4
      %s18 = int_to_ptr.vmem [resolvable:$true] %s17
      %23 = dma.hbm_to_vmem [thread:$0]  %s0, 512, %s18, [#allocation3], 128, 128, 8
    $region5: #{tpu_custom_call.1} parent=1 // pred_fallthru
      _
    // Predicated region
    $region6: #{tpu_custom_call.1} parent=1 // pred_check
      _
    $region7: #{tpu_custom_call.1} parent=1 // pred_check_branch
      %25 = sbr.rel (0) target = $region9
    $region8: #{tpu_custom_call.1} parent=1 // pred_region
      %s27 = ssub.s32 1024, 1024
      %28 = vsyncadd [#allocation6], %s27
      %s30 = sshll.u32 [#allocation5], 4
      %s31 = int_to_ptr.vmem [resolvable:$true] %s30
      %33 = dma.hbm_to_vmem [thread:$0]  %s1, 1024, %s31, [#allocation6]
    $region9: #{tpu_custom_call.1} parent=1 // pred_fallthru
      _
    // Predicated region
    $region10: #{tpu_custom_call.1} parent=1 // pred_check
      _
    $region11: #{tpu_custom_call.1} parent=1 // pred_check_branch
      %35 = sbr.rel (0) target = $region13
    $region12: #{tpu_custom_call.1} parent=1 // pred_region
      %s37 = ssub.s32 8192, 8192
      %38 = vsyncadd [#allocation6], %s37
      %s39 = sshll.u32 [#allocation7], 4
      %s40 = int_to_ptr.vmem [resolvable:$true] %s39
      %45 = dma.hbm_to_vmem [thread:$0]  %s2, 8192, %s40, [#allocation6], 64, 64, 4
    $region13: #{tpu_custom_call.1} parent=1 // pred_fallthru
      _
    // Predicated region
    $region14: #{tpu_custom_call.1} parent=1 // pred_check
      _
    $region15: #{tpu_custom_call.1} parent=1 // pred_check_branch
      %47 = sbr.rel (0) target = $region17
    $region16: #{tpu_custom_call.1} parent=1 // pred_region
      _
    $region17: #{tpu_custom_call.1} parent=1 // pred_fallthru
      _
    // Predicated region
    $region18: #{tpu_custom_call.1} parent=1 // pred_check
      _
    $region19: #{tpu_custom_call.1} parent=1 // pred_check_branch
      %49 = sbr.rel (0) target = $region21
    $region20: #{tpu_custom_call.1} parent=1 // pred_region
      %50 = dma.done [#allocation3], 512
    $region21: #{tpu_custom_call.1} parent=1 // pred_fallthru
      _
    // Predicated region
    $region22: #{tpu_custom_call.1} parent=1 // pred_check
      _
    $region23: #{tpu_custom_call.1} parent=1 // pred_check_branch
      %52 = sbr.rel (0) target = $region25
    $region24: #{tpu_custom_call.1} parent=1 // pred_region
      %53 = dma.done [#allocation6], 1024
    $region25: #{tpu_custom_call.1} parent=1 // pred_fallthru
      _
    // Predicated region
    $region26: #{tpu_custom_call.1} parent=1 // pred_check
      _
    $region27: #{tpu_custom_call.1} parent=1 // pred_check_branch
      %55 = sbr.rel (0) target = $region29
    $region28: #{tpu_custom_call.1} parent=1 // pred_region
      %56 = dma.done [#allocation6], 8192
    $region29: #{tpu_custom_call.1} parent=1 // pred_fallthru
      _
    %v58 = vld [vmem:[#allocation2] sm:$0xff]
    %v59 = vld [vmem:[#allocation2 + $0x8] sm:$0xff]
    %v60 = vld [vmem:[#allocation2 + $0x10] sm:$0xff]
    %v61 = vld [vmem:[#allocation2 + $0x18] sm:$0xff]
    %v62 = vld [vmem:[#allocation5] sm:$0xff]
    %v63 = vld [vmem:[#allocation5 + $0x8] sm:$0xff]
    %v64 = vld [vmem:[#allocation5 + $0x10] sm:$0xff]
    %v65 = vld [vmem:[#allocation5 + $0x18] sm:$0xff]
    %v66 = vld [vmem:[#allocation5 + $0x20] sm:$0xff]
    %v67 = vld [vmem:[#allocation5 + $0x28] sm:$0xff]
    %v68 = vld [vmem:[#allocation5 + $0x30] sm:$0xff]
    %v69 = vld [vmem:[#allocation5 + $0x38] sm:$0xff]
    %v74 = vlaneseq
    %v75 = vshrl.u32 %v74, 7
    %v76 = vsub.s32 0, %v75
    %v77 = vrot.slane %v58, %v76
    %v78 = vlaneseq
    %v79 = vshrl.u32 %v78, 7
    %v80 = vsub.s32 1, %v79
    %v81 = vrot.slane %v58, %v80
    %v82 = vlaneseq
    %v83 = vshrl.u32 %v82, 7
    %v84 = vsub.s32 2, %v83
    %v85 = vrot.slane %v58, %v84
    %v86 = vlaneseq
    %v87 = vshrl.u32 %v86, 7
    %v88 = vsub.s32 3, %v87
    %v89 = vrot.slane %v58, %v88
    %v90 = vlaneseq
    %v91 = vshrl.u32 %v90, 7
    %v92 = vsub.s32 4, %v91
    %v93 = vrot.slane %v58, %v92
    %v94 = vlaneseq
    %v95 = vshrl.u32 %v94, 7
    %v96 = vsub.s32 5, %v95
    %v97 = vrot.slane %v58, %v96
    %v98 = vlaneseq
    %v99 = vshrl.u32 %v98, 7
    %v100 = vsub.s32 6, %v99
    %v101 = vrot.slane %v58, %v100
    %v102 = vlaneseq
    %v103 = vshrl.u32 %v102, 7
    %v104 = vsub.s32 7, %v103
    %v105 = vrot.slane %v58, %v104
    %v106 = vlaneseq
    %v107 = vshrl.u32 %v106, 7
    %v108 = vsub.s32 0, %v107
    %v109 = vrot.slane %v59, %v108
    %v110 = vlaneseq
    %v111 = vshrl.u32 %v110, 7
    %v112 = vsub.s32 1, %v111
    %v113 = vrot.slane %v59, %v112
    %v114 = vlaneseq
    %v115 = vshrl.u32 %v114, 7
    %v116 = vsub.s32 2, %v115
    %v117 = vrot.slane %v59, %v116
    %v118 = vlaneseq
    %v119 = vshrl.u32 %v118, 7
    %v120 = vsub.s32 3, %v119
    %v121 = vrot.slane %v59, %v120
    %v122 = vlaneseq
    %v123 = vshrl.u32 %v122, 7
    %v124 = vsub.s32 4, %v123
    %v125 = vrot.slane %v59, %v124
    %v126 = vlaneseq
    %v127 = vshrl.u32 %v126, 7
    %v128 = vsub.s32 5, %v127
    %v129 = vrot.slane %v59, %v128
    %v130 = vlaneseq
    %v131 = vshrl.u32 %v130, 7
    %v132 = vsub.s32 6, %v131
    %v133 = vrot.slane %v59, %v132
    %v134 = vlaneseq
    %v135 = vshrl.u32 %v134, 7
    %v136 = vsub.s32 7, %v135
    %v137 = vrot.slane %v59, %v136
    %v138 = vlaneseq
    %v139 = vshrl.u32 %v138, 7
    %v140 = vsub.s32 0, %v139
    %v141 = vrot.slane %v60, %v140
    %v142 = vlaneseq
    %v143 = vshrl.u32 %v142, 7
    %v144 = vsub.s32 1, %v143
    %v145 = vrot.slane %v60, %v144
    %v146 = vlaneseq
    %v147 = vshrl.u32 %v146, 7
    %v148 = vsub.s32 2, %v147
    %v149 = vrot.slane %v60, %v148
    %v150 = vlaneseq
    %v151 = vshrl.u32 %v150, 7
    %v152 = vsub.s32 3, %v151
    %v153 = vrot.slane %v60, %v152
    %v154 = vlaneseq
    %v155 = vshrl.u32 %v154, 7
    %v156 = vsub.s32 4, %v155
    %v157 = vrot.slane %v60, %v156
    %v158 = vlaneseq
    %v159 = vshrl.u32 %v158, 7
    %v160 = vsub.s32 5, %v159
    %v161 = vrot.slane %v60, %v160
    %v162 = vlaneseq
    %v163 = vshrl.u32 %v162, 7
    %v164 = vsub.s32 6, %v163
    %v165 = vrot.slane %v60, %v164
    %v166 = vlaneseq
    %v167 = vshrl.u32 %v166, 7
    %v168 = vsub.s32 7, %v167
    %v169 = vrot.slane %v60, %v168
    %v170 = vlaneseq
    %v171 = vshrl.u32 %v170, 7
    %v172 = vsub.s32 0, %v171
    %v173 = vrot.slane %v61, %v172
    %v174 = vlaneseq
    %v175 = vshrl.u32 %v174, 7
    %v176 = vsub.s32 1, %v175
    %v177 = vrot.slane %v61, %v176
    %v178 = vlaneseq
    %v179 = vshrl.u32 %v178, 7
    %v180 = vsub.s32 2, %v179
    %v181 = vrot.slane %v61, %v180
    %v182 = vlaneseq
    %v183 = vshrl.u32 %v182, 7
    %v184 = vsub.s32 3, %v183
    %v185 = vrot.slane %v61, %v184
    %v186 = vlaneseq
    %v187 = vshrl.u32 %v186, 7
    %v188 = vsub.s32 4, %v187
    %v189 = vrot.slane %v61, %v188
    %v190 = vlaneseq
    %v191 = vshrl.u32 %v190, 7
    %v192 = vsub.s32 5, %v191
    %v193 = vrot.slane %v61, %v192
    %v194 = vlaneseq
    %v195 = vshrl.u32 %v194, 7
    %v196 = vsub.s32 6, %v195
    %v197 = vrot.slane %v61, %v196
    %v198 = vlaneseq
    %v199 = vshrl.u32 %v198, 7
    %v200 = vsub.s32 7, %v199
    %v201 = vrot.slane %v61, %v200
    %v234 = vadd.f32 %v77, %v62
    %v235 = vadd.f32 %v81, %v63
    %v236 = vadd.f32 %v85, %v64
    %v237 = vadd.f32 %v89, %v65
    %v238 = vadd.f32 %v93, %v66
    %v239 = vadd.f32 %v97, %v67
    %v240 = vadd.f32 %v101, %v68
    %v241 = vadd.f32 %v105, %v69
    %v242 = vadd.f32 %v109, %v62
    %v243 = vadd.f32 %v113, %v63
    %v244 = vadd.f32 %v117, %v64
    %v245 = vadd.f32 %v121, %v65
    %v246 = vadd.f32 %v125, %v66
    %v247 = vadd.f32 %v129, %v67
    %v248 = vadd.f32 %v133, %v68
    %v249 = vadd.f32 %v137, %v69
    %v250 = vadd.f32 %v141, %v62
    %v251 = vadd.f32 %v145, %v63
    %v252 = vadd.f32 %v149, %v64
    %v253 = vadd.f32 %v153, %v65
    %v254 = vadd.f32 %v157, %v66
    %v255 = vadd.f32 %v161, %v67
    %v256 = vadd.f32 %v165, %v68
    %v257 = vadd.f32 %v169, %v69
    %v258 = vadd.f32 %v173, %v62
    %v259 = vadd.f32 %v177, %v63
    %v260 = vadd.f32 %v181, %v64
    %v261 = vadd.f32 %v185, %v65
    %v262 = vadd.f32 %v189, %v66
    %v263 = vadd.f32 %v193, %v67
    %v264 = vadd.f32 %v197, %v68
    %v265 = vadd.f32 %v201, %v69
    %v266 = vpack.c.bf16 %v242, %v234
    %v267 = vpack.c.bf16 %v243, %v235
    %v268 = vpack.c.bf16 %v244, %v236
    %v269 = vpack.c.bf16 %v245, %v237
    %v270 = vpack.c.bf16 %v246, %v238
    %v271 = vpack.c.bf16 %v247, %v239
    %v272 = vpack.c.bf16 %v248, %v240
    %v273 = vpack.c.bf16 %v249, %v241
    %v274 = vpack.c.bf16 %v258, %v250
    %v275 = vpack.c.bf16 %v259, %v251
    %v276 = vpack.c.bf16 %v260, %v252
    %v277 = vpack.c.bf16 %v261, %v253
    %v278 = vpack.c.bf16 %v262, %v254
    %v279 = vpack.c.bf16 %v263, %v255
    %v280 = vpack.c.bf16 %v264, %v256
    %v281 = vpack.c.bf16 %v265, %v257
    %v282 = vld [vmem:[#allocation7] sm:$0xf]
    %v283 = vld [vmem:[#allocation7 + $0x4] sm:$0xf]
    %v284 = vld [vmem:[#allocation7 + $0x8] sm:$0xf]
    %v285 = vld [vmem:[#allocation7 + $0xc] sm:$0xf]
    %v286 = vld [vmem:[#allocation7 + $0x10] sm:$0xf]
    %v287 = vld [vmem:[#allocation7 + $0x14] sm:$0xf]
    %v288 = vld [vmem:[#allocation7 + $0x18] sm:$0xf]
    %v289 = vld [vmem:[#allocation7 + $0x1c] sm:$0xf]
    %v290 = vld [vmem:[#allocation7 + $0x20] sm:$0xf]
    %v291 = vld [vmem:[#allocation7 + $0x24] sm:$0xf]
    %v292 = vld [vmem:[#allocation7 + $0x28] sm:$0xf]
    %v293 = vld [vmem:[#allocation7 + $0x2c] sm:$0xf]
    %v294 = vld [vmem:[#allocation7 + $0x30] sm:$0xf]
    %v295 = vld [vmem:[#allocation7 + $0x34] sm:$0xf]
    %v296 = vld [vmem:[#allocation7 + $0x38] sm:$0xf]
    %v297 = vld [vmem:[#allocation7 + $0x3c] sm:$0xf]
    %v298 = vld [vmem:[#allocation7 + $0x40] sm:$0xf]
    %v299 = vld [vmem:[#allocation7 + $0x44] sm:$0xf]
    %v300 = vld [vmem:[#allocation7 + $0x48] sm:$0xf]
    %v301 = vld [vmem:[#allocation7 + $0x4c] sm:$0xf]
    %v302 = vld [vmem:[#allocation7 + $0x50] sm:$0xf]
    %v303 = vld [vmem:[#allocation7 + $0x54] sm:$0xf]
    %v304 = vld [vmem:[#allocation7 + $0x58] sm:$0xf]
    %v305 = vld [vmem:[#allocation7 + $0x5c] sm:$0xf]
    %v306 = vld [vmem:[#allocation7 + $0x60] sm:$0xf]
    %v307 = vld [vmem:[#allocation7 + $0x64] sm:$0xf]
    %v308 = vld [vmem:[#allocation7 + $0x68] sm:$0xf]
    %v309 = vld [vmem:[#allocation7 + $0x6c] sm:$0xf]
    %v310 = vld [vmem:[#allocation7 + $0x70] sm:$0xf]
    %v311 = vld [vmem:[#allocation7 + $0x74] sm:$0xf]
    %v312 = vld [vmem:[#allocation7 + $0x78] sm:$0xf]
    %v313 = vld [vmem:[#allocation7 + $0x7c] sm:$0xf]
    %v314 = vld [vmem:[#allocation7 + $0x80] sm:$0xf]
    %v315 = vld [vmem:[#allocation7 + $0x84] sm:$0xf]
    %v316 = vld [vmem:[#allocation7 + $0x88] sm:$0xf]
    %v317 = vld [vmem:[#allocation7 + $0x8c] sm:$0xf]
    %v318 = vld [vmem:[#allocation7 + $0x90] sm:$0xf]
    %v319 = vld [vmem:[#allocation7 + $0x94] sm:$0xf]
    %v320 = vld [vmem:[#allocation7 + $0x98] sm:$0xf]
    %v321 = vld [vmem:[#allocation7 + $0x9c] sm:$0xf]
    %v322 = vld [vmem:[#allocation7 + $0xa0] sm:$0xf]
    %v323 = vld [vmem:[#allocation7 + $0xa4] sm:$0xf]
    %v324 = vld [vmem:[#allocation7 + $0xa8] sm:$0xf]
    %v325 = vld [vmem:[#allocation7 + $0xac] sm:$0xf]
    %v326 = vld [vmem:[#allocation7 + $0xb0] sm:$0xf]
    %v327 = vld [vmem:[#allocation7 + $0xb4] sm:$0xf]
    %v328 = vld [vmem:[#allocation7 + $0xb8] sm:$0xf]
    %v329 = vld [vmem:[#allocation7 + $0xbc] sm:$0xf]
    %v330 = vld [vmem:[#allocation7 + $0xc0] sm:$0xf]
    %v331 = vld [vmem:[#allocation7 + $0xc4] sm:$0xf]
    %v332 = vld [vmem:[#allocation7 + $0xc8] sm:$0xf]
    %v333 = vld [vmem:[#allocation7 + $0xcc] sm:$0xf]
    %v334 = vld [vmem:[#allocation7 + $0xd0] sm:$0xf]
    %v335 = vld [vmem:[#allocation7 + $0xd4] sm:$0xf]
    %v336 = vld [vmem:[#allocation7 + $0xd8] sm:$0xf]
    %v337 = vld [vmem:[#allocation7 + $0xdc] sm:$0xf]
    %v338 = vld [vmem:[#allocation7 + $0xe0] sm:$0xf]
    %v339 = vld [vmem:[#allocation7 + $0xe4] sm:$0xf]
    %v340 = vld [vmem:[#allocation7 + $0xe8] sm:$0xf]
    %v341 = vld [vmem:[#allocation7 + $0xec] sm:$0xf]
    %v342 = vld [vmem:[#allocation7 + $0xf0] sm:$0xf]
    %v343 = vld [vmem:[#allocation7 + $0xf4] sm:$0xf]
    %v344 = vld [vmem:[#allocation7 + $0xf8] sm:$0xf]
    %v345 = vld [vmem:[#allocation7 + $0xfc] sm:$0xf]
    %v346 = vld [vmem:[#allocation7 + $0x100] sm:$0xf]
    %v347 = vld [vmem:[#allocation7 + $0x104] sm:$0xf]
    %v348 = vld [vmem:[#allocation7 + $0x108] sm:$0xf]
    %v349 = vld [vmem:[#allocation7 + $0x10c] sm:$0xf]
    %v350 = vld [vmem:[#allocation7 + $0x110] sm:$0xf]
    %v351 = vld [vmem:[#allocation7 + $0x114] sm:$0xf]
    %v352 = vld [vmem:[#allocation7 + $0x118] sm:$0xf]
    %v353 = vld [vmem:[#allocation7 + $0x11c] sm:$0xf]
    %v354 = vld [vmem:[#allocation7 + $0x120] sm:$0xf]
    %v355 = vld [vmem:[#allocation7 + $0x124] sm:$0xf]
    %v356 = vld [vmem:[#allocation7 + $0x128] sm:$0xf]
    %v357 = vld [vmem:[#allocation7 + $0x12c] sm:$0xf]
    %v358 = vld [vmem:[#allocation7 + $0x130] sm:$0xf]
    %v359 = vld [vmem:[#allocation7 + $0x134] sm:$0xf]
    %v360 = vld [vmem:[#allocation7 + $0x138] sm:$0xf]
    %v361 = vld [vmem:[#allocation7 + $0x13c] sm:$0xf]
    %v362 = vld [vmem:[#allocation7 + $0x140] sm:$0xf]
    %v363 = vld [vmem:[#allocation7 + $0x144] sm:$0xf]
    %v364 = vld [vmem:[#allocation7 + $0x148] sm:$0xf]
    %v365 = vld [vmem:[#allocation7 + $0x14c] sm:$0xf]
    %v366 = vld [vmem:[#allocation7 + $0x150] sm:$0xf]
    %v367 = vld [vmem:[#allocation7 + $0x154] sm:$0xf]
    %v368 = vld [vmem:[#allocation7 + $0x158] sm:$0xf]
    %v369 = vld [vmem:[#allocation7 + $0x15c] sm:$0xf]
    %v370 = vld [vmem:[#allocation7 + $0x160] sm:$0xf]
    %v371 = vld [vmem:[#allocation7 + $0x164] sm:$0xf]
    %v372 = vld [vmem:[#allocation7 + $0x168] sm:$0xf]
    %v373 = vld [vmem:[#allocation7 + $0x16c] sm:$0xf]
    %v374 = vld [vmem:[#allocation7 + $0x170] sm:$0xf]
    %v375 = vld [vmem:[#allocation7 + $0x174] sm:$0xf]
    %v376 = vld [vmem:[#allocation7 + $0x178] sm:$0xf]
    %v377 = vld [vmem:[#allocation7 + $0x17c] sm:$0xf]
    %v378 = vld [vmem:[#allocation7 + $0x180] sm:$0xf]
    %v379 = vld [vmem:[#allocation7 + $0x184] sm:$0xf]
    %v380 = vld [vmem:[#allocation7 + $0x188] sm:$0xf]
    %v381 = vld [vmem:[#allocation7 + $0x18c] sm:$0xf]
    %v382 = vld [vmem:[#allocation7 + $0x190] sm:$0xf]
    %v383 = vld [vmem:[#allocation7 + $0x194] sm:$0xf]
    %v384 = vld [vmem:[#allocation7 + $0x198] sm:$0xf]
    %v385 = vld [vmem:[#allocation7 + $0x19c] sm:$0xf]
    %v386 = vld [vmem:[#allocation7 + $0x1a0] sm:$0xf]
    %v387 = vld [vmem:[#allocation7 + $0x1a4] sm:$0xf]
    %v388 = vld [vmem:[#allocation7 + $0x1a8] sm:$0xf]
    %v389 = vld [vmem:[#allocation7 + $0x1ac] sm:$0xf]
    %v390 = vld [vmem:[#allocation7 + $0x1b0] sm:$0xf]
    %v391 = vld [vmem:[#allocation7 + $0x1b4] sm:$0xf]
    %v392 = vld [vmem:[#allocation7 + $0x1b8] sm:$0xf]
    %v393 = vld [vmem:[#allocation7 + $0x1bc] sm:$0xf]
    %v394 = vld [vmem:[#allocation7 + $0x1c0] sm:$0xf]
    %v395 = vld [vmem:[#allocation7 + $0x1c4] sm:$0xf]
    %v396 = vld [vmem:[#allocation7 + $0x1c8] sm:$0xf]
    %v397 = vld [vmem:[#allocation7 + $0x1cc] sm:$0xf]
    %v398 = vld [vmem:[#allocation7 + $0x1d0] sm:$0xf]
    %v399 = vld [vmem:[#allocation7 + $0x1d4] sm:$0xf]
    %v400 = vld [vmem:[#allocation7 + $0x1d8] sm:$0xf]
    %v401 = vld [vmem:[#allocation7 + $0x1dc] sm:$0xf]
    %v402 = vld [vmem:[#allocation7 + $0x1e0] sm:$0xf]
    %v403 = vld [vmem:[#allocation7 + $0x1e4] sm:$0xf]
    %v404 = vld [vmem:[#allocation7 + $0x1e8] sm:$0xf]
    %v405 = vld [vmem:[#allocation7 + $0x1ec] sm:$0xf]
    %v406 = vld [vmem:[#allocation7 + $0x1f0] sm:$0xf]
    %v407 = vld [vmem:[#allocation7 + $0x1f4] sm:$0xf]
    %v408 = vld [vmem:[#allocation7 + $0x1f8] sm:$0xf]
    %v409 = vld [vmem:[#allocation7 + $0x1fc] sm:$0xf]
    %v410 = vld [vmem:[%s3] sm:$0x1]
    %v412 = vlaneseq
    %v413 = vshrl.u32 %v412, 7
    %v414 = vsub.s32 0, %v413
    %v415 = vrot.slane %v410, %v414
    %v545 = vunpack.c.l.b16 %v282
    %v546 = vunpack.c.l.b16 %v283
    %v547 = vunpack.c.l.b16 %v284
    %v548 = vunpack.c.l.b16 %v285
    %v549 = vunpack.c.l.b16 %v286
    %v550 = vunpack.c.l.b16 %v287
    %v551 = vunpack.c.l.b16 %v288
    %v552 = vunpack.c.l.b16 %v289
    %v553 = vunpack.c.l.b16 %v290
    %v554 = vunpack.c.l.b16 %v291
    %v555 = vunpack.c.l.b16 %v292
    %v556 = vunpack.c.l.b16 %v293
    %v557 = vunpack.c.l.b16 %v294
    %v558 = vunpack.c.l.b16 %v295
    %v559 = vunpack.c.l.b16 %v296
    %v560 = vunpack.c.l.b16 %v297
    %v561 = vunpack.c.l.b16 %v298
    %v562 = vunpack.c.l.b16 %v299
    %v563 = vunpack.c.l.b16 %v300
    %v564 = vunpack.c.l.b16 %v301
    %v565 = vunpack.c.l.b16 %v302
    %v566 = vunpack.c.l.b16 %v303
    %v567 = vunpack.c.l.b16 %v304
    %v568 = vunpack.c.l.b16 %v305
    %v569 = vunpack.c.l.b16 %v306
    %v570 = vunpack.c.l.b16 %v307
    %v571 = vunpack.c.l.b16 %v308
    %v572 = vunpack.c.l.b16 %v309
    %v573 = vunpack.c.l.b16 %v310
    %v574 = vunpack.c.l.b16 %v311
    %v575 = vunpack.c.l.b16 %v312
    %v576 = vunpack.c.l.b16 %v313
    %v577 = vunpack.c.l.b16 %v314
    %v578 = vunpack.c.l.b16 %v315
    %v579 = vunpack.c.l.b16 %v316
    %v580 = vunpack.c.l.b16 %v317
    %v581 = vunpack.c.l.b16 %v318
    %v582 = vunpack.c.l.b16 %v319
    %v583 = vunpack.c.l.b16 %v320
    %v584 = vunpack.c.l.b16 %v321
    %v585 = vunpack.c.l.b16 %v322
    %v586 = vunpack.c.l.b16 %v323
    %v587 = vunpack.c.l.b16 %v324
    %v588 = vunpack.c.l.b16 %v325
    %v589 = vunpack.c.l.b16 %v326
    %v590 = vunpack.c.l.b16 %v327
    %v591 = vunpack.c.l.b16 %v328
    %v592 = vunpack.c.l.b16 %v329
    %v593 = vunpack.c.l.b16 %v330
    %v594 = vunpack.c.l.b16 %v331
    %v595 = vunpack.c.l.b16 %v332
    %v596 = vunpack.c.l.b16 %v333
    %v597 = vunpack.c.l.b16 %v334
    %v598 = vunpack.c.l.b16 %v335
    %v599 = vunpack.c.l.b16 %v336
    %v600 = vunpack.c.l.b16 %v337
    %v601 = vunpack.c.l.b16 %v338
    %v602 = vunpack.c.l.b16 %v339
    %v603 = vunpack.c.l.b16 %v340
    %v604 = vunpack.c.l.b16 %v341
    %v605 = vunpack.c.l.b16 %v342
    %v606 = vunpack.c.l.b16 %v343
    %v607 = vunpack.c.l.b16 %v344
    %v608 = vunpack.c.l.b16 %v345
    %v609 = vunpack.c.l.b16 %v346
    %v610 = vunpack.c.l.b16 %v347
    %v611 = vunpack.c.l.b16 %v348
    %v612 = vunpack.c.l.b16 %v349
    %v613 = vunpack.c.l.b16 %v350
    %v614 = vunpack.c.l.b16 %v351
    %v615 = vunpack.c.l.b16 %v352
    %v616 = vunpack.c.l.b16 %v353
    %v617 = vunpack.c.l.b16 %v354
    %v618 = vunpack.c.l.b16 %v355
    %v619 = vunpack.c.l.b16 %v356
    %v620 = vunpack.c.l.b16 %v357
    %v621 = vunpack.c.l.b16 %v358
    %v622 = vunpack.c.l.b16 %v359
    %v623 = vunpack.c.l.b16 %v360
    %v624 = vunpack.c.l.b16 %v361
    %v625 = vunpack.c.l.b16 %v362
    %v626 = vunpack.c.l.b16 %v363
    %v627 = vunpack.c.l.b16 %v364
    %v628 = vunpack.c.l.b16 %v365
    %v629 = vunpack.c.l.b16 %v366
    %v630 = vunpack.c.l.b16 %v367
    %v631 = vunpack.c.l.b16 %v368
    %v632 = vunpack.c.l.b16 %v369
    %v633 = vunpack.c.l.b16 %v370
    %v634 = vunpack.c.l.b16 %v371
    %v635 = vunpack.c.l.b16 %v372
    %v636 = vunpack.c.l.b16 %v373
    %v637 = vunpack.c.l.b16 %v374
    %v638 = vunpack.c.l.b16 %v375
    %v639 = vunpack.c.l.b16 %v376
    %v640 = vunpack.c.l.b16 %v377
    %v641 = vunpack.c.l.b16 %v378
    %v642 = vunpack.c.l.b16 %v379
    %v643 = vunpack.c.l.b16 %v380
    %v644 = vunpack.c.l.b16 %v381
    %v645 = vunpack.c.l.b16 %v382
    %v646 = vunpack.c.l.b16 %v383
    %v647 = vunpack.c.l.b16 %v384
    %v648 = vunpack.c.l.b16 %v385
    %v649 = vunpack.c.l.b16 %v386
    %v650 = vunpack.c.l.b16 %v387
    %v651 = vunpack.c.l.b16 %v388
    %v652 = vunpack.c.l.b16 %v389
    %v653 = vunpack.c.l.b16 %v390
    %v654 = vunpack.c.l.b16 %v391
    %v655 = vunpack.c.l.b16 %v392
    %v656 = vunpack.c.l.b16 %v393
    %v657 = vunpack.c.l.b16 %v394
    %v658 = vunpack.c.l.b16 %v395
    %v659 = vunpack.c.l.b16 %v396
    %v660 = vunpack.c.l.b16 %v397
    %v661 = vunpack.c.l.b16 %v398
    %v662 = vunpack.c.l.b16 %v399
    %v663 = vunpack.c.l.b16 %v400
    %v664 = vunpack.c.l.b16 %v401
    %v665 = vunpack.c.l.b16 %v402
    %v666 = vunpack.c.l.b16 %v403
    %v667 = vunpack.c.l.b16 %v404
    %v668 = vunpack.c.l.b16 %v405
    %v669 = vunpack.c.l.b16 %v406
    %v670 = vunpack.c.l.b16 %v407
    %v671 = vunpack.c.l.b16 %v408
    %v672 = vunpack.c.l.b16 %v409
    %v673 = vpack.c.b16 %v546, %v545
    %v674 = vpack.c.b16 %v548, %v547
    %v675 = vpack.c.b16 %v550, %v549
    %v676 = vpack.c.b16 %v552, %v551
    %v677 = vpack.c.b16 %v554, %v553
    %v678 = vpack.c.b16 %v556, %v555
    %v679 = vpack.c.b16 %v558, %v557
    %v680 = vpack.c.b16 %v560, %v559
    %v681 = vpack.c.b16 %v562, %v561
    %v682 = vpack.c.b16 %v564, %v563
    %v683 = vpack.c.b16 %v566, %v565
    %v684 = vpack.c.b16 %v568, %v567
    %v685 = vpack.c.b16 %v570, %v569
    %v686 = vpack.c.b16 %v572, %v571
    %v687 = vpack.c.b16 %v574, %v573
    %v688 = vpack.c.b16 %v576, %v575
    %v689 = vpack.c.b16 %v578, %v577
    %v690 = vpack.c.b16 %v580, %v579
    %v691 = vpack.c.b16 %v582, %v581
    %v692 = vpack.c.b16 %v584, %v583
    %v693 = vpack.c.b16 %v586, %v585
    %v694 = vpack.c.b16 %v588, %v587
    %v695 = vpack.c.b16 %v590, %v589
    %v696 = vpack.c.b16 %v592, %v591
    %v697 = vpack.c.b16 %v594, %v593
    %v698 = vpack.c.b16 %v596, %v595
    %v699 = vpack.c.b16 %v598, %v597
    %v700 = vpack.c.b16 %v600, %v599
    %v701 = vpack.c.b16 %v602, %v601
    %v702 = vpack.c.b16 %v604, %v603
    %v703 = vpack.c.b16 %v606, %v605
    %v704 = vpack.c.b16 %v608, %v607
    %v705 = vpack.c.b16 %v610, %v609
    %v706 = vpack.c.b16 %v612, %v611
    %v707 = vpack.c.b16 %v614, %v613
    %v708 = vpack.c.b16 %v616, %v615
    %v709 = vpack.c.b16 %v618, %v617
    %v710 = vpack.c.b16 %v620, %v619
    %v711 = vpack.c.b16 %v622, %v621
    %v712 = vpack.c.b16 %v624, %v623
    %v713 = vpack.c.b16 %v626, %v625
    %v714 = vpack.c.b16 %v628, %v627
    %v715 = vpack.c.b16 %v630, %v629
    %v716 = vpack.c.b16 %v632, %v631
    %v717 = vpack.c.b16 %v634, %v633
    %v718 = vpack.c.b16 %v636, %v635
    %v719 = vpack.c.b16 %v638, %v637
    %v720 = vpack.c.b16 %v640, %v639
    %v721 = vpack.c.b16 %v642, %v641
    %v722 = vpack.c.b16 %v644, %v643
    %v723 = vpack.c.b16 %v646, %v645
    %v724 = vpack.c.b16 %v648, %v647
    %v725 = vpack.c.b16 %v650, %v649
    %v726 = vpack.c.b16 %v652, %v651
    %v727 = vpack.c.b16 %v654, %v653
    %v728 = vpack.c.b16 %v656, %v655
    %v729 = vpack.c.b16 %v658, %v657
    %v730 = vpack.c.b16 %v660, %v659
    %v731 = vpack.c.b16 %v662, %v661
    %v732 = vpack.c.b16 %v664, %v663
    %v733 = vpack.c.b16 %v666, %v665
    %v734 = vpack.c.b16 %v668, %v667
    %v735 = vpack.c.b16 %v670, %v669
    %v736 = vpack.c.b16 %v672, %v671
    %801 = vmatprep.subr.bf16.mxu0 0
    %802 = vmatpush1.bf16.msra.mxu0 %v673
    %803 = vmatprep.subr.bf16.mxu0 0
    %804 = vmatpush1.bf16.msra.mxu0 %v674
    %805 = vmatprep.subr.bf16.mxu0 0
    %806 = vmatpush1.bf16.msra.mxu0 %v675
    %807 = vmatprep.subr.bf16.mxu0 0
    %808 = vmatpush1.bf16.msra.mxu0 %v676
    %809 = vmatprep.subr.bf16.mxu0 0
    %810 = vmatpush1.bf16.msra.mxu0 %v677
    %811 = vmatprep.subr.bf16.mxu0 0
    %812 = vmatpush1.bf16.msra.mxu0 %v678
    %813 = vmatprep.subr.bf16.mxu0 0
    %814 = vmatpush1.bf16.msra.mxu0 %v679
    %815 = vmatprep.subr.bf16.mxu0 0
    %816 = vmatpush1.bf16.msra.mxu0 %v680
    %817 = vmatprep.subr.bf16.mxu0 0
    %818 = vmatpush1.bf16.msra.mxu0 %v681
    %819 = vmatprep.subr.bf16.mxu0 0
    %820 = vmatpush1.bf16.msra.mxu0 %v682
    %821 = vmatprep.subr.bf16.mxu0 0
    %822 = vmatpush1.bf16.msra.mxu0 %v683
    %823 = vmatprep.subr.bf16.mxu0 0
    %824 = vmatpush1.bf16.msra.mxu0 %v684
    %825 = vmatprep.subr.bf16.mxu0 0
    %826 = vmatpush1.bf16.msra.mxu0 %v685
    %827 = vmatprep.subr.bf16.mxu0 0
    %828 = vmatpush1.bf16.msra.mxu0 %v686
    %829 = vmatprep.subr.bf16.mxu0 0
    %830 = vmatpush1.bf16.msra.mxu0 %v687
    %831 = vmatprep.subr.bf16.mxu0 0
    %832 = vmatpush1.bf16.msra.mxu0 %v688
    %833 = vmatprep.mubr.bf16.mxu0 %v267
    %834 = vmatmul.mubr.bf16.gmra.mrb[0].mxu0 %v266
    %v835 = vpop.f32.mrb[0].mxu0
    %v836 = vadd.f32 %v415, %v835
    %v837 = vpop.f32.mrb[0].mxu0
    %v838 = vpop.f32.mrb[0].mxu0
    %v839 = vadd.f32 %v415, %v838
    %v840 = vpop.f32.mrb[0].mxu0
    %841 = vmatprep.mubr.bf16.mxu0 %v275
    %842 = vmatmul.mubr.bf16.gmra.mrb[0].mxu0 %v274
    %v843 = vpop.f32.mrb[0].mxu0
    %v844 = vadd.f32 %v415, %v843
    %v845 = vpop.f32.mrb[0].mxu0
    %v846 = vpop.f32.mrb[0].mxu0
    %v847 = vadd.f32 %v415, %v846
    %v848 = vpop.f32.mrb[0].mxu0
    %849 = vdwg.mxu0
    %850 = vmatprep.subr.bf16.mxu0 0
    %851 = vmatpush1.bf16.msra.mxu0 %v689
    %852 = vmatprep.subr.bf16.mxu0 0
    %853 = vmatpush1.bf16.msra.mxu0 %v690
    %854 = vmatprep.subr.bf16.mxu0 0
    %855 = vmatpush1.bf16.msra.mxu0 %v691
    %856 = vmatprep.subr.bf16.mxu0 0
    %857 = vmatpush1.bf16.msra.mxu0 %v692
    %858 = vmatprep.subr.bf16.mxu0 0
    %859 = vmatpush1.bf16.msra.mxu0 %v693
    %860 = vmatprep.subr.bf16.mxu0 0
    %861 = vmatpush1.bf16.msra.mxu0 %v694
    %862 = vmatprep.subr.bf16.mxu0 0
    %863 = vmatpush1.bf16.msra.mxu0 %v695
    %864 = vmatprep.subr.bf16.mxu0 0
    %865 = vmatpush1.bf16.msra.mxu0 %v696
    %866 = vmatprep.subr.bf16.mxu0 0
    %867 = vmatpush1.bf16.msra.mxu0 %v697
    %868 = vmatprep.subr.bf16.mxu0 0
    %869 = vmatpush1.bf16.msra.mxu0 %v698
    %870 = vmatprep.subr.bf16.mxu0 0
    %871 = vmatpush1.bf16.msra.mxu0 %v699
    %872 = vmatprep.subr.bf16.mxu0 0
    %873 = vmatpush1.bf16.msra.mxu0 %v700
    %874 = vmatprep.subr.bf16.mxu0 0
    %875 = vmatpush1.bf16.msra.mxu0 %v701
    %876 = vmatprep.subr.bf16.mxu0 0
    %877 = vmatpush1.bf16.msra.mxu0 %v702
    %878 = vmatprep.subr.bf16.mxu0 0
    %879 = vmatpush1.bf16.msra.mxu0 %v703
    %880 = vmatprep.subr.bf16.mxu0 0
    %881 = vmatpush1.bf16.msra.mxu0 %v704
    %882 = vmatprep.mubr.bf16.mxu0 %v269
    %883 = vmatmul.mubr.bf16.gmra.mrb[0].mxu0 %v268
    %v884 = vpop.f32.mrb[0].mxu0
    %v885 = vadd.f32 %v836, %v884
    %v886 = vpop.f32.mrb[0].mxu0
    %v887 = vpop.f32.mrb[0].mxu0
    %v888 = vadd.f32 %v839, %v887
    %v889 = vpop.f32.mrb[0].mxu0
    %890 = vmatprep.mubr.bf16.mxu0 %v277
    %891 = vmatmul.mubr.bf16.gmra.mrb[0].mxu0 %v276
    %v892 = vpop.f32.mrb[0].mxu0
    %v893 = vadd.f32 %v844, %v892
    %v894 = vpop.f32.mrb[0].mxu0
    %v895 = vpop.f32.mrb[0].mxu0
    %v896 = vadd.f32 %v847, %v895
    %v897 = vpop.f32.mrb[0].mxu0
    %898 = vdwg.mxu0
    %899 = vmatprep.subr.bf16.mxu0 0
    %900 = vmatpush1.bf16.msra.mxu0 %v705
    %901 = vmatprep.subr.bf16.mxu0 0
    %902 = vmatpush1.bf16.msra.mxu0 %v706
    %903 = vmatprep.subr.bf16.mxu0 0
    %904 = vmatpush1.bf16.msra.mxu0 %v707
    %905 = vmatprep.subr.bf16.mxu0 0
    %906 = vmatpush1.bf16.msra.mxu0 %v708
    %907 = vmatprep.subr.bf16.mxu0 0
    %908 = vmatpush1.bf16.msra.mxu0 %v709
    %909 = vmatprep.subr.bf16.mxu0 0
    %910 = vmatpush1.bf16.msra.mxu0 %v710
    %911 = vmatprep.subr.bf16.mxu0 0
    %912 = vmatpush1.bf16.msra.mxu0 %v711
    %913 = vmatprep.subr.bf16.mxu0 0
    %914 = vmatpush1.bf16.msra.mxu0 %v712
    %915 = vmatprep.subr.bf16.mxu0 0
    %916 = vmatpush1.bf16.msra.mxu0 %v713
    %917 = vmatprep.subr.bf16.mxu0 0
    %918 = vmatpush1.bf16.msra.mxu0 %v714
    %919 = vmatprep.subr.bf16.mxu0 0
    %920 = vmatpush1.bf16.msra.mxu0 %v715
    %921 = vmatprep.subr.bf16.mxu0 0
    %922 = vmatpush1.bf16.msra.mxu0 %v716
    %923 = vmatprep.subr.bf16.mxu0 0
    %924 = vmatpush1.bf16.msra.mxu0 %v717
    %925 = vmatprep.subr.bf16.mxu0 0
    %926 = vmatpush1.bf16.msra.mxu0 %v718
    %927 = vmatprep.subr.bf16.mxu0 0
    %928 = vmatpush1.bf16.msra.mxu0 %v719
    %929 = vmatprep.subr.bf16.mxu0 0
    %930 = vmatpush1.bf16.msra.mxu0 %v720
    %931 = vmatprep.mubr.bf16.mxu0 %v271
    %932 = vmatmul.mubr.bf16.gmra.mrb[0].mxu0 %v270
    %v933 = vpop.f32.mrb[0].mxu0
    %v934 = vadd.f32 %v885, %v933
    %v935 = vpop.f32.mrb[0].mxu0
    %v936 = vpop.f32.mrb[0].mxu0
    %v937 = vadd.f32 %v888, %v936
    %v938 = vpop.f32.mrb[0].mxu0
    %939 = vmatprep.mubr.bf16.mxu0 %v279
    %940 = vmatmul.mubr.bf16.gmra.mrb[0].mxu0 %v278
    %v941 = vpop.f32.mrb[0].mxu0
    %v942 = vadd.f32 %v893, %v941
    %v943 = vpop.f32.mrb[0].mxu0
    %v944 = vpop.f32.mrb[0].mxu0
    %v945 = vadd.f32 %v896, %v944
    %v946 = vpop.f32.mrb[0].mxu0
    %947 = vdwg.mxu0
    %948 = vmatprep.subr.bf16.mxu0 0
    %949 = vmatpush1.bf16.msra.mxu0 %v721
    %950 = vmatprep.subr.bf16.mxu0 0
    %951 = vmatpush1.bf16.msra.mxu0 %v722
    %952 = vmatprep.subr.bf16.mxu0 0
    %953 = vmatpush1.bf16.msra.mxu0 %v723
    %954 = vmatprep.subr.bf16.mxu0 0
    %955 = vmatpush1.bf16.msra.mxu0 %v724
    %956 = vmatprep.subr.bf16.mxu0 0
    %957 = vmatpush1.bf16.msra.mxu0 %v725
    %958 = vmatprep.subr.bf16.mxu0 0
    %959 = vmatpush1.bf16.msra.mxu0 %v726
    %960 = vmatprep.subr.bf16.mxu0 0
    %961 = vmatpush1.bf16.msra.mxu0 %v727
    %962 = vmatprep.subr.bf16.mxu0 0
    %963 = vmatpush1.bf16.msra.mxu0 %v728
    %964 = vmatprep.subr.bf16.mxu0 0
    %965 = vmatpush1.bf16.msra.mxu0 %v729
    %966 = vmatprep.subr.bf16.mxu0 0
    %967 = vmatpush1.bf16.msra.mxu0 %v730
    %968 = vmatprep.subr.bf16.mxu0 0
    %969 = vmatpush1.bf16.msra.mxu0 %v731
    %970 = vmatprep.subr.bf16.mxu0 0
    %971 = vmatpush1.bf16.msra.mxu0 %v732
    %972 = vmatprep.subr.bf16.mxu0 0
    %973 = vmatpush1.bf16.msra.mxu0 %v733
    %974 = vmatprep.subr.bf16.mxu0 0
    %975 = vmatpush1.bf16.msra.mxu0 %v734
    %976 = vmatprep.subr.bf16.mxu0 0
    %977 = vmatpush1.bf16.msra.mxu0 %v735
    %978 = vmatprep.subr.bf16.mxu0 0
    %979 = vmatpush1.bf16.msra.mxu0 %v736
    %980 = vmatprep.mubr.bf16.mxu0 %v273
    %981 = vmatmul.mubr.bf16.gmra.mrb[0].mxu0 %v272
    %v982 = vpop.f32.mrb[0].mxu0
    %v983 = vadd.f32 %v934, %v982
    %v984 = vpop.f32.mrb[0].mxu0
    %v985 = vpop.f32.mrb[0].mxu0
    %v986 = vadd.f32 %v937, %v985
    %v987 = vpop.f32.mrb[0].mxu0
    %988 = vmatprep.mubr.bf16.mxu0 %v281
    %989 = vmatmul.mubr.bf16.gmra.mrb[0].mxu0 %v280
    %v990 = vpop.f32.mrb[0].mxu0
    %v991 = vadd.f32 %v942, %v990
    %v992 = vpop.f32.mrb[0].mxu0
    %v993 = vpop.f32.mrb[0].mxu0
    %v994 = vadd.f32 %v945, %v993
    %v995 = vpop.f32.mrb[0].mxu0
    %996 = vdwg.mxu0
    %997 = vmax.xlane.f32.xlu0 %v983
    %v998 = vpop.xlane.xlu0 %997
    %999 = vmax.xlane.f32.xlu0 %v986
    %v1000 = vpop.xlane.xlu0 %999
    %1001 = vmax.xlane.f32.xlu0 %v991
    %v1002 = vpop.xlane.xlu0 %1001
    %1003 = vmax.xlane.f32.xlu0 %v994
    %v1004 = vpop.xlane.xlu0 %1003
    %v1005 = vsub.f32 %v983, %v998
    %v1006 = vsub.f32 %v986, %v1000
    %v1007 = vsub.f32 %v991, %v1002
    %v1008 = vsub.f32 %v994, %v1004
    %v1009 = vmul.f32 %v1005, 1.442695
    %v1010 = vpow.pop %v1009
    %v1011 = vmul.f32 %v1006, 1.442695
    %v1012 = vpow.pop %v1011
    %v1013 = vmul.f32 %v1007, 1.442695
    %v1014 = vpow.pop %v1013
    %v1015 = vmul.f32 %v1008, 1.442695
    %v1016 = vpow.pop %v1015
    %1017 = vadd.xlane.f32.xlu0 %v1010
    %v1018 = vpop.xlane.xlu0 %1017
    %1019 = vadd.xlane.f32.xlu0 %v1012
    %v1020 = vpop.xlane.xlu0 %1019
    %1021 = vadd.xlane.f32.xlu0 %v1014
    %v1022 = vpop.xlane.xlu0 %1021
    %1023 = vadd.xlane.f32.xlu0 %v1016
    %v1024 = vpop.xlane.xlu0 %1023
    %v1025 = vmul.f32 %v1018, 8.0
    %v1026 = vmul.f32 %v1020, 8.0
    %v1027 = vmul.f32 %v1022, 8.0
    %v1028 = vmul.f32 %v1024, 8.0
    %v1029 = vrcp.pop %v1025
    %v1030 = vrcp.pop %v1026
    %v1031 = vrcp.pop %v1027
    %v1032 = vrcp.pop %v1028
    %v1033 = vmul.f32 %v1010, %v1029
    %v1034 = vmul.f32 %v1012, %v1030
    %v1035 = vmul.f32 %v1014, %v1031
    %v1036 = vmul.f32 %v1016, %v1032
    %v1037 = vrot.slane %v1033, 4
    %v1038 = vadd.f32 %v1033, %v1037
    %v1039 = vrot.slane %v1038, 2
    %v1040 = vadd.f32 %v1038, %v1039
    %v1041 = vrot.slane %v1040, 1
    %v1042 = vadd.f32 %v1040, %v1041
    %v1043 = vrot.slane %v1034, 4
    %v1044 = vadd.f32 %v1034, %v1043
    %v1045 = vrot.slane %v1044, 2
    %v1046 = vadd.f32 %v1044, %v1045
    %v1047 = vrot.slane %v1046, 1
    %v1048 = vadd.f32 %v1046, %v1047
    %v1049 = vrot.slane %v1035, 4
    %v1050 = vadd.f32 %v1035, %v1049
    %v1051 = vrot.slane %v1050, 2
    %v1052 = vadd.f32 %v1050, %v1051
    %v1053 = vrot.slane %v1052, 1
    %v1054 = vadd.f32 %v1052, %v1053
    %v1055 = vrot.slane %v1036, 4
    %v1056 = vadd.f32 %v1036, %v1055
    %v1057 = vrot.slane %v1056, 2
    %v1058 = vadd.f32 %v1056, %v1057
    %v1059 = vrot.slane %v1058, 1
    %v1060 = vadd.f32 %v1058, %v1059
    %v1061 = vmax.f32 %v1042, 1e-20
    %v1062 = vmax.f32 %v1048, 1e-20
    %v1063 = vmax.f32 %v1054, 1e-20
    %v1064 = vmax.f32 %v1060, 1e-20
    %v1065 = vlog2.pop %v1061
    %v1066 = vmul.f32 %v1065, 0.6931472
    %v1067 = vlog2.pop %v1062
    %v1068 = vmul.f32 %v1067, 0.6931472
    %v1069 = vlog2.pop %v1063
    %v1070 = vmul.f32 %v1069, 0.6931472
    %v1071 = vlog2.pop %v1064
    %v1072 = vmul.f32 %v1071, 0.6931472
    %vm1077 = vcmask 1041409
    %v1078 = vsel %vm1077, %v1068, %v1066
    %vm1079 = vcmask 1042434
    %v1080 = vsel %vm1079, %v1070, %v1078
    %vm1081 = vcmask 1043459
    %v1082 = vsel %vm1081, %v1072, %v1080
    %1084 = vst [vmem:[#allocation8] sm:$0xf] %v1082
    // Predicated region
    $region30: #{tpu_custom_call.1} parent=1 // pred_check
      _
    $region31: #{tpu_custom_call.1} parent=1 // pred_check_branch
      %1086 = sbr.rel (0) target = $region33
    $region32: #{tpu_custom_call.1} parent=1 // pred_region
      %s1088 = ssub.s32 64, 64
      %1089 = vsyncadd [#allocation4], %s1088
      %s1091 = sshll.u32 [#allocation8], 4
      %s1092 = int_to_ptr.vmem [resolvable:$true] %s1091
      %1094 = dma.vmem_to_hbm [thread:$0]  %s1092, 64, %s4, [#allocation4]
    $region33: #{tpu_custom_call.1} parent=1 // pred_fallthru
      _
    // Predicated region
    $region34: #{tpu_custom_call.1} parent=1 // pred_check
      _
    $region35: #{tpu_custom_call.1} parent=1 // pred_check_branch
      %1096 = sbr.rel (0) target = $region37
    $region36: #{tpu_custom_call.1} parent=1 // pred_region
      %1097 = dma.done [#allocation4], 64
    $region37: #{tpu_custom_call.1} parent=1 // pred_fallthru
      _
    %1098 = vsyncpa [#allocation3], 1
    %1099 = vsyncpa [#allocation6], 1
    %1100 = vsyncpa [#allocation4], 1

</llo_original>
